<compile_context>
chip_gen: v6e
topology: v6e:2x2x1
jax: 0.10.0
libtpu: 0.0.40
codegen_flags: <defaults>
</compile_context>

<pallas_src>
import math

import jax
import jax.numpy as jnp
from jax.experimental import pallas as pl
from jax.experimental.pallas import tpu as pltpu


# --------------------------------------------------------------------------
# Problem constants (mirroring the PyTorch script)
# --------------------------------------------------------------------------
N_ANTENNA = 64
N_WIDE_BEAM = 32
N_NARROW_BEAM = 64
BATCH = 8

NOISE_POWER_DBM = -94
TX_POWER_DBM = 30
# NOTE: kept verbatim from the PyTorch script (10 ** (noise_dBm - tx_dBm/10));
# it evaluates to ~1e-97, so the noise term underflows f32 to exactly 0. The
# add is retained for structural fidelity to the module's forward().
NOISE_POWER = 10 ** (NOISE_POWER_DBM - TX_POWER_DBM / 10)
NORM_FACTOR = 1.0

# Padded (lane-dense) layout
LANE = 128
F_IN = 2 * N_ANTENNA          # 128, already lane dense
F_BF = 2 * LANE               # 256: real beams in lanes [0,128), imag in [128,256)
F_HID = LANE                  # all hidden / output feature dims padded to 128


# --------------------------------------------------------------------------
# Pallas kernel: fused Beam_Classifier forward (single invocation, all VMEM)
# --------------------------------------------------------------------------
def beam_classifier_kernel(x_ref, cb_ref, noise_ref, w_ref, b_ref, o_ref):
    # bf_signal = x @ codebook + noise   -> (B, 256), lane-dense real|imag halves
    bf = jnp.dot(x_ref[...], cb_ref[...], preferred_element_type=jnp.float32)
    bf = bf + noise_ref[...]

    # ComputePower(2*n_wide_beam): |.|^2 with the split on a 128-lane (vreg) boundary.
    real = bf[:, :LANE]
    imag = bf[:, LANE:]
    h = real * real + imag * imag            # >= 0 => the module's ReLU here is a no-op

    # dense1 -> relu   (packed weight rows [0, 128) = W1, bias row 0)
    h = jnp.maximum(
        jnp.dot(h, w_ref[0:LANE, :], preferred_element_type=jnp.float32)
        + b_ref[0:1, :], 0.0)

    # dense2 -> relu   (packed weight rows [128, 256) = W2, bias row 1)
    h = jnp.maximum(
        jnp.dot(h, w_ref[LANE:2 * LANE, :], preferred_element_type=jnp.float32)
        + b_ref[1:2, :], 0.0)

    # dense3 (no softmax in forward; packed weight rows [256, 384) = W3, bias row 2)
    o_ref[...] = (
        jnp.dot(h, w_ref[2 * LANE:3 * LANE, :], preferred_element_type=jnp.float32)
        + b_ref[2:3, :]).astype(o_ref.dtype)


def beam_classifier_forward(x, codebook_p, noise_p, w_packed, b_packed):
    """Single pallas_call over full VMEM blocks (shapes are tiny -> no grid)."""
    B = x.shape[0]
    vmem = pl.BlockSpec(memory_space=pltpu.MemorySpace.VMEM)

    flops = 2 * B * (F_IN * F_BF + 3 * LANE * LANE)
    bytes_accessed = 4 * (x.size + codebook_p.size + noise_p.size
                          + w_packed.size + b_packed.size + B * LANE)

    out_p = pl.pallas_call(
        beam_classifier_kernel,
        out_shape=jax.ShapeDtypeStruct((B, LANE), jnp.float32),
        in_specs=[vmem] * 5,
        out_specs=vmem,
        cost_estimate=pl.CostEstimate(flops=flops, transcendentals=0,
                                      bytes_accessed=bytes_accessed),
    )(x, codebook_p, noise_p, w_packed, b_packed)

    # Valid logits live in the first n_narrow_beam lanes of the padded output.
    return out_p[:, :N_NARROW_BEAM]


# --------------------------------------------------------------------------
# Deterministic parameter construction (synthetic; mirrors __init__ shapes)
# --------------------------------------------------------------------------
def make_params(key):
    k_theta, k1, k2, k3, kb1, kb2, kb3 = jax.random.split(key, 7)

    # PhaseShifter: theta (n_antenna, n_wide_beam) ~ U(0, 2*pi), scale = sqrt(n_antenna)
    theta = jax.random.uniform(k_theta, (N_ANTENNA, N_WIDE_BEAM),
                               minval=0.0, maxval=2.0 * math.pi, dtype=jnp.float32)
    scale = math.sqrt(N_ANTENNA)
    real_k = jnp.cos(theta) / scale
    imag_k = jnp.sin(theta) / scale
    # Unpadded block matrix (2*n_antenna, 2*n_wide_beam) -- used by the reference.
    top = jnp.concatenate([real_k, -imag_k], axis=1)
    bot = jnp.concatenate([imag_k, real_k], axis=1)
    codebook = jnp.concatenate([top, bot], axis=0)          # (128, 64)

    def linear_init(kw, kb, fan_in, fan_out):
        bound = 1.0 / math.sqrt(fan_in)
        w = jax.random.uniform(kw, (fan_in, fan_out), minval=-bound, maxval=bound,
                               dtype=jnp.float32)
        b = jax.random.uniform(kb, (1, fan_out), minval=-bound, maxval=bound,
                               dtype=jnp.float32)
        return w, b

    w1, b1 = linear_init(k1, kb1, N_WIDE_BEAM, 2 * N_WIDE_BEAM)      # (32, 64)
    w2, b2 = linear_init(k2, kb2, 2 * N_WIDE_BEAM, 3 * N_WIDE_BEAM)  # (64, 96)
    w3, b3 = linear_init(k3, kb3, 3 * N_WIDE_BEAM, N_NARROW_BEAM)    # (96, 64)
    return codebook, (w1, b1, w2, b2, w3, b3)


def pack_params_lane_dense(codebook, params):
    """Zero-pad every feature dim to 128 lanes and pack the MLP weights/biases
    into two operands. Zero padding is a no-op through the dot/ReLU chain."""
    w1, b1, w2, b2, w3, b3 = params

    # codebook -> (128, 256): real output columns in lanes [0,32), imag output
    # columns in lanes [128,160), rest zero.
    cb_p = jnp.zeros((F_IN, F_BF), jnp.float32)
    cb_p = cb_p.at[:, 0:N_WIDE_BEAM].set(codebook[:, :N_WIDE_BEAM])
    cb_p = cb_p.at[:, LANE:LANE + N_WIDE_BEAM].set(codebook[:, N_WIDE_BEAM:])

    def pad2(w):
        out = jnp.zeros((LANE, LANE), jnp.float32)
        return out.at[:w.shape[0], :w.shape[1]].set(w)

    # (384, 128) weight slab: rows [0,128)=W1, [128,256)=W2, [256,384)=W3.
    w_packed = jnp.concatenate([pad2(w1), pad2(w2), pad2(w3)], axis=0)

    # (8, 128) bias tile: row 0 = b1, row 1 = b2, row 2 = b3, rest zero.
    b_packed = jnp.zeros((8, LANE), jnp.float32)
    b_packed = b_packed.at[0, :b1.shape[1]].set(b1[0])
    b_packed = b_packed.at[1, :b2.shape[1]].set(b2[0])
    b_packed = b_packed.at[2, :b3.shape[1]].set(b3[0])
    return cb_p, w_packed, b_packed


def pad_noise(noise):
    """(B, 2*n_wide_beam) noise -> (B, 256), same lane layout as the padded codebook."""
    B = noise.shape[0]
    n_p = jnp.zeros((B, F_BF), jnp.float32)
    n_p = n_p.at[:, 0:N_WIDE_BEAM].set(noise[:, :N_WIDE_BEAM])
    n_p = n_p.at[:, LANE:LANE + N_WIDE_BEAM].set(noise[:, N_WIDE_BEAM:])
    return n_p


if __name__ == "__main__":
    key = jax.random.PRNGKey(0)
    k_params, k_x, k_noise = jax.random.split(key, 3)

    codebook, params = make_params(k_params)
    cb_p, w_packed, b_packed = pack_params_lane_dense(codebook, params)

    # Input: (batch, 2*n_antenna) real-valued channel representation
    x = jax.random.normal(k_x, (BATCH, 2 * N_ANTENNA), dtype=jnp.float32)

    # noise_vec = N(0,1) * sqrt(noise_power/2) / norm_factor (host-side RNG glue,
    # added inside the kernel, matching torch.normal in forward()).
    noise = (jax.random.normal(k_noise, (BATCH, 2 * N_WIDE_BEAM), dtype=jnp.float32)
             * math.sqrt(NOISE_POWER / 2.0) / NORM_FACTOR)
    noise_p = pad_noise(noise)

    out = beam_classifier_forward(x, cb_p, noise_p, w_packed, b_packed)
    jax.block_until_ready(out)

    # quick sanity check vs. pure-JAX reference on the UNPADDED parameters
    def ref_forward(x, cb, noise, params):
        w1, b1, w2, b2, w3, b3 = params
        bf = x @ cb + noise
        nwb = bf.shape[1] // 2
        p = bf[:, :nwb] ** 2 + bf[:, nwb:] ** 2
        h = jnp.maximum(p, 0.0)
        h = jnp.maximum(h @ w1 + b1, 0.0)
        h = jnp.maximum(h @ w2 + b2, 0.0)
        return h @ w3 + b3

    ref = ref_forward(x, codebook, noise, params)
    assert out.shape == (BATCH, N_NARROW_BEAM)
    assert jnp.allclose(out, ref, atol=1e-5, rtol=1e-5)

    print("KERNEL_OK")
</pallas_src>

<mosaic_0001>
module attributes {stable_mosaic.version = 11 : i64} {
  func.func @beam_classifier_kernel(%arg0: memref<8x128xf32, #tpu.memory_space<vmem>>, %arg1: memref<128x256xf32, #tpu.memory_space<vmem>>, %arg2: memref<8x256xf32, #tpu.memory_space<vmem>>, %arg3: memref<384x128xf32, #tpu.memory_space<vmem>>, %arg4: memref<8x128xf32, #tpu.memory_space<vmem>>, %arg5: memref<8x128xf32, #tpu.memory_space<vmem>>) attributes {dimension_semantics = [], scalar_prefetch = 0 : i64, scratch_operands = 0 : i64, tpu.core_type = #tpu.core_type<tc>} {
    %c0 = arith.constant 0 : index
    %c0_0 = arith.constant 0 : index
    %0 = vector.load %arg0[%c0, %c0_0] : memref<8x128xf32, #tpu.memory_space<vmem>>, vector<8x128xf32>
    %c0_1 = arith.constant 0 : index
    %c0_2 = arith.constant 0 : index
    %1 = vector.load %arg1[%c0_1, %c0_2] : memref<128x256xf32, #tpu.memory_space<vmem>>, vector<128x256xf32>
    %cst = arith.constant dense<0.000000e+00> : vector<8x256xf32>
    %2 = tpu.matmul %0, %1, %cst {dimension_numbers = #tpu.dot_dimension_numbers<[1], [0], [0], [1], [0, 0, 1, 1], [], []>} : vector<8x128xf32>, vector<128x256xf32>, vector<8x256xf32> -> vector<8x256xf32>
    %c0_3 = arith.constant 0 : index
    %c0_4 = arith.constant 0 : index
    %3 = vector.load %arg2[%c0_3, %c0_4] : memref<8x256xf32, #tpu.memory_space<vmem>>, vector<8x256xf32>
    %4 = arith.addf %2, %3 : vector<8x256xf32>
    %5 = vector.extract_strided_slice %4 {offsets = [0, 0], sizes = [8, 128], strides = [1, 1]} : vector<8x256xf32> to vector<8x128xf32>
    %6 = vector.extract_strided_slice %4 {offsets = [0, 128], sizes = [8, 128], strides = [1, 1]} : vector<8x256xf32> to vector<8x128xf32>
    %7 = arith.mulf %5, %5 : vector<8x128xf32>
    %8 = arith.mulf %6, %6 : vector<8x128xf32>
    %9 = arith.addf %7, %8 : vector<8x128xf32>
    %c0_5 = arith.constant 0 : index
    %c0_6 = arith.constant 0 : index
    %10 = vector.load %arg3[%c0_5, %c0_6] : memref<384x128xf32, #tpu.memory_space<vmem>>, vector<128x128xf32>
    %cst_7 = arith.constant dense<0.000000e+00> : vector<8x128xf32>
    %11 = tpu.matmul %9, %10, %cst_7 {dimension_numbers = #tpu.dot_dimension_numbers<[1], [0], [0], [1], [0, 0, 1, 1], [], []>} : vector<8x128xf32>, vector<128x128xf32>, vector<8x128xf32> -> vector<8x128xf32>
    %c0_8 = arith.constant 0 : index
    %c0_9 = arith.constant 0 : index
    %12 = vector.load %arg4[%c0_8, %c0_9] : memref<8x128xf32, #tpu.memory_space<vmem>>, vector<1x128xf32>
    %13 = vector.broadcast %12 : vector<1x128xf32> to vector<8x128xf32>
    %14 = arith.addf %11, %13 : vector<8x128xf32>
    %cst_10 = arith.constant 0.000000e+00 : f32
    %15 = vector.broadcast %cst_10 : f32 to vector<8x128xf32>
    %16 = arith.maximumf %14, %15 : vector<8x128xf32>
    %c128 = arith.constant 128 : index
    %c0_11 = arith.constant 0 : index
    %17 = vector.load %arg3[%c128, %c0_11] : memref<384x128xf32, #tpu.memory_space<vmem>>, vector<128x128xf32>
    %cst_12 = arith.constant dense<0.000000e+00> : vector<8x128xf32>
    %18 = tpu.matmul %16, %17, %cst_12 {dimension_numbers = #tpu.dot_dimension_numbers<[1], [0], [0], [1], [0, 0, 1, 1], [], []>} : vector<8x128xf32>, vector<128x128xf32>, vector<8x128xf32> -> vector<8x128xf32>
    %c1 = arith.constant 1 : index
    %c0_13 = arith.constant 0 : index
    %19 = vector.load %arg4[%c1, %c0_13] : memref<8x128xf32, #tpu.memory_space<vmem>>, vector<1x128xf32>
    %20 = vector.broadcast %19 : vector<1x128xf32> to vector<8x128xf32>
    %21 = arith.addf %18, %20 : vector<8x128xf32>
    %cst_14 = arith.constant 0.000000e+00 : f32
    %22 = vector.broadcast %cst_14 : f32 to vector<8x128xf32>
    %23 = arith.maximumf %21, %22 : vector<8x128xf32>
    %c256 = arith.constant 256 : index
    %c0_15 = arith.constant 0 : index
    %24 = vector.load %arg3[%c256, %c0_15] : memref<384x128xf32, #tpu.memory_space<vmem>>, vector<128x128xf32>
    %cst_16 = arith.constant dense<0.000000e+00> : vector<8x128xf32>
    %25 = tpu.matmul %23, %24, %cst_16 {dimension_numbers = #tpu.dot_dimension_numbers<[1], [0], [0], [1], [0, 0, 1, 1], [], []>} : vector<8x128xf32>, vector<128x128xf32>, vector<8x128xf32> -> vector<8x128xf32>
    %c2 = arith.constant 2 : index
    %c0_17 = arith.constant 0 : index
    %26 = vector.load %arg4[%c2, %c0_17] : memref<8x128xf32, #tpu.memory_space<vmem>>, vector<1x128xf32>
    %27 = vector.broadcast %26 : vector<1x128xf32> to vector<8x128xf32>
    %28 = arith.addf %25, %27 : vector<8x128xf32>
    %c0_18 = arith.constant 0 : index
    %c0_19 = arith.constant 0 : index
    %29 = vector.load %arg5[%c0_18, %c0_19] : memref<8x128xf32, #tpu.memory_space<vmem>>, vector<8x128xf32>
    tpu.vector_store %arg5[%c0_18, %c0_19], %28 {strides = array<i32>} : memref<8x128xf32, #tpu.memory_space<vmem>>, vector<8x128xf32>,
    return
  }
}

</mosaic_0001>

<llo_original>
// kernel: tpu_custom_call.1
$region0: #{tpu_custom_call.1}
  #allocation0 [shape = 'u32[]', space=smem, size = 0x4, offset = 0x4, fixed_abs, tag = 'smem constant byte address 0x4 - core index']
  #allocation1 [shape = 'u32[144,128]{1,0:T(1,128)}', space=vmem, size = 0x12000, scoped, tag = 'internal scratch']
  %s0 = inlined_call_operand.hbm [shape: f32[8,128], index: 0, kind: input, shape index: {}]
  %s1 = inlined_call_operand.hbm [shape: f32[128,256], index: 1, kind: input, shape index: {}]
  %s2 = inlined_call_operand.hbm [shape: f32[8,256], index: 2, kind: input, shape index: {}]
  %s3 = inlined_call_operand.hbm [shape: f32[384,128], index: 3, kind: input, shape index: {}]
  %s4 = inlined_call_operand.hbm [shape: f32[8,128], index: 4, kind: input, shape index: {}]
  %s5 = inlined_call_operand.hbm [shape: f32[8,128], index: 5, kind: output, shape index: {}]
  %s6 = sld [smem:[#allocation0]]
  $region50: #{tpu_custom_call.1} parent=0
    _
  %s8 = ssub.s32 1, %s6
  %s9 = scalar_select 0, %s8, %s6
  $region1: #{tpu_custom_call.1} parent=0
    #allocation2 [shape = 'u8[4096]{0}', space=vmem, size = 0x1000, scoped, tag = 'input window, operand 0, single buffered']
    #allocation3 [shape = 's32[1]{0}', space=sflag, size = 0x4, scoped, tag = 'scoped memory for tpu_custom_call.1']
    #allocation4 [shape = 's32[1]{0}', space=sflag, size = 0x4, scoped, tag = 'scoped memory for tpu_custom_call.1']
    #allocation5 [shape = 'u8[131072]{0}', space=vmem, size = 0x20000, scoped, tag = 'input window, operand 1, single buffered']
    #allocation6 [shape = 's32[1]{0}', space=sflag, size = 0x4, scoped, tag = 'scoped memory for tpu_custom_call.1']
    #allocation7 [shape = 'u8[8192]{0}', space=vmem, size = 0x2000, scoped, tag = 'input window, operand 2, single buffered']
    #allocation8 [shape = 'u8[196608]{0}', space=vmem, size = 0x30000, scoped, tag = 'input window, operand 3, single buffered']
    #allocation9 [shape = 's32[1]{0}', space=sflag, size = 0x4, scoped, tag = 'scoped memory for tpu_custom_call.1']
    #allocation10 [shape = 'u8[4096]{0}', space=vmem, size = 0x1000, scoped, tag = 'input window, operand 4, single buffered']
    #allocation11 [shape = 'u8[4096]{0}', space=vmem, size = 0x1000, scoped, tag = 'output window, operand 0, single buffered']
    %10 = vsyncpa [#allocation3], 0
    %11 = vsyncpa [#allocation6], 0
    %12 = vsyncpa [#allocation9], 0
    %13 = vsyncpa [#allocation4], 0
    // Predicated region
    $region2: #{tpu_custom_call.1} parent=1 // pred_check
      _
    $region3: #{tpu_custom_call.1} parent=1 // pred_check_branch
      %15 = sbr.rel (0) target = $region5
    $region4: #{tpu_custom_call.1} parent=1 // pred_region
      %s17 = ssub.s32 128, 128
      %18 = vsyncadd [#allocation3], %s17
      %s20 = sshll.u32 [#allocation2], 4
      %s21 = int_to_ptr.vmem [resolvable:$true] %s20
      %23 = dma.hbm_to_vmem [thread:$0]  %s0, 128, %s21, [#allocation3]
    $region5: #{tpu_custom_call.1} parent=1 // pred_fallthru
      _
    // Predicated region
    $region6: #{tpu_custom_call.1} parent=1 // pred_check
      _
    $region7: #{tpu_custom_call.1} parent=1 // pred_check_branch
      %25 = sbr.rel (0) target = $region9
    $region8: #{tpu_custom_call.1} parent=1 // pred_region
      %s27 = ssub.s32 4096, 4096
      %28 = vsyncadd [#allocation6], %s27
      %s29 = sshll.u32 [#allocation5], 4
      %s30 = int_to_ptr.vmem [resolvable:$true] %s29
      %35 = dma.hbm_to_vmem [thread:$0]  %s1, 4096, %s30, [#allocation6], 256, 256, 16
    $region9: #{tpu_custom_call.1} parent=1 // pred_fallthru
      _
    // Predicated region
    $region10: #{tpu_custom_call.1} parent=1 // pred_check
      _
    $region11: #{tpu_custom_call.1} parent=1 // pred_check_branch
      %37 = sbr.rel (0) target = $region13
    $region12: #{tpu_custom_call.1} parent=1 // pred_region
      %s39 = ssub.s32 256, 256
      %40 = vsyncadd [#allocation6], %s39
      %s42 = sshll.u32 [#allocation7], 4
      %s43 = int_to_ptr.vmem [resolvable:$true] %s42
      %45 = dma.hbm_to_vmem [thread:$0]  %s2, 256, %s43, [#allocation6]
    $region13: #{tpu_custom_call.1} parent=1 // pred_fallthru
      _
    // Predicated region
    $region14: #{tpu_custom_call.1} parent=1 // pred_check
      _
    $region15: #{tpu_custom_call.1} parent=1 // pred_check_branch
      %47 = sbr.rel (0) target = $region17
    $region16: #{tpu_custom_call.1} parent=1 // pred_region
      %s49 = ssub.s32 6144, 6144
      %50 = vsyncadd [#allocation9], %s49
      %s51 = sshll.u32 [#allocation8], 4
      %s52 = int_to_ptr.vmem [resolvable:$true] %s51
      %57 = dma.hbm_to_vmem [thread:$0]  %s3, 6144, %s52, [#allocation9], 128, 128, 8
    $region17: #{tpu_custom_call.1} parent=1 // pred_fallthru
      _
    // Predicated region
    $region18: #{tpu_custom_call.1} parent=1 // pred_check
      _
    $region19: #{tpu_custom_call.1} parent=1 // pred_check_branch
      %59 = sbr.rel (0) target = $region21
    $region20: #{tpu_custom_call.1} parent=1 // pred_region
      %s61 = ssub.s32 128, 128
      %62 = vsyncadd [#allocation9], %s61
      %s64 = sshll.u32 [#allocation10], 4
      %s65 = int_to_ptr.vmem [resolvable:$true] %s64
      %67 = dma.hbm_to_vmem [thread:$0]  %s4, 128, %s65, [#allocation9]
    $region21: #{tpu_custom_call.1} parent=1 // pred_fallthru
      _
    // Predicated region
    $region22: #{tpu_custom_call.1} parent=1 // pred_check
      _
    $region23: #{tpu_custom_call.1} parent=1 // pred_check_branch
      %69 = sbr.rel (0) target = $region25
    $region24: #{tpu_custom_call.1} parent=1 // pred_region
      %70 = dma.done [#allocation3], 128
    $region25: #{tpu_custom_call.1} parent=1 // pred_fallthru
      _
    // Predicated region
    $region26: #{tpu_custom_call.1} parent=1 // pred_check
      _
    $region27: #{tpu_custom_call.1} parent=1 // pred_check_branch
      %72 = sbr.rel (0) target = $region29
    $region28: #{tpu_custom_call.1} parent=1 // pred_region
      %73 = dma.done [#allocation6], 4096
    $region29: #{tpu_custom_call.1} parent=1 // pred_fallthru
      _
    // Predicated region
    $region30: #{tpu_custom_call.1} parent=1 // pred_check
      _
    $region31: #{tpu_custom_call.1} parent=1 // pred_check_branch
      %75 = sbr.rel (0) target = $region33
    $region32: #{tpu_custom_call.1} parent=1 // pred_region
      %76 = dma.done [#allocation6], 256
    $region33: #{tpu_custom_call.1} parent=1 // pred_fallthru
      _
    // Predicated region
    $region34: #{tpu_custom_call.1} parent=1 // pred_check
      _
    $region35: #{tpu_custom_call.1} parent=1 // pred_check_branch
      %78 = sbr.rel (0) target = $region37
    $region36: #{tpu_custom_call.1} parent=1 // pred_region
      %79 = dma.done [#allocation9], 6144
    $region37: #{tpu_custom_call.1} parent=1 // pred_fallthru
      _
    // Predicated region
    $region38: #{tpu_custom_call.1} parent=1 // pred_check
      _
    $region39: #{tpu_custom_call.1} parent=1 // pred_check_branch
      %81 = sbr.rel (0) target = $region41
    $region40: #{tpu_custom_call.1} parent=1 // pred_region
      %82 = dma.done [#allocation9], 128
    $region41: #{tpu_custom_call.1} parent=1 // pred_fallthru
      _
    %v83 = vld [vmem:[#allocation2] sm:$0xff]
    %v84 = vld [vmem:[#allocation5] sm:$0xff]
    %v85 = vld [vmem:[#allocation5 + $0x8] sm:$0xff]
    %v86 = vld [vmem:[#allocation5 + $0x10] sm:$0xff]
    %v87 = vld [vmem:[#allocation5 + $0x18] sm:$0xff]
    %v88 = vld [vmem:[#allocation5 + $0x20] sm:$0xff]
    %v89 = vld [vmem:[#allocation5 + $0x28] sm:$0xff]
    %v90 = vld [vmem:[#allocation5 + $0x30] sm:$0xff]
    %v91 = vld [vmem:[#allocation5 + $0x38] sm:$0xff]
    %v92 = vld [vmem:[#allocation5 + $0x40] sm:$0xff]
    %v93 = vld [vmem:[#allocation5 + $0x48] sm:$0xff]
    %v94 = vld [vmem:[#allocation5 + $0x50] sm:$0xff]
    %v95 = vld [vmem:[#allocation5 + $0x58] sm:$0xff]
    %v96 = vld [vmem:[#allocation5 + $0x60] sm:$0xff]
    %v97 = vld [vmem:[#allocation5 + $0x68] sm:$0xff]
    %v98 = vld [vmem:[#allocation5 + $0x70] sm:$0xff]
    %v99 = vld [vmem:[#allocation5 + $0x78] sm:$0xff]
    %v100 = vld [vmem:[#allocation5 + $0x80] sm:$0xff]
    %v101 = vld [vmem:[#allocation5 + $0x88] sm:$0xff]
    %v102 = vld [vmem:[#allocation5 + $0x90] sm:$0xff]
    %v103 = vld [vmem:[#allocation5 + $0x98] sm:$0xff]
    %v104 = vld [vmem:[#allocation5 + $0xa0] sm:$0xff]
    %v105 = vld [vmem:[#allocation5 + $0xa8] sm:$0xff]
    %v106 = vld [vmem:[#allocation5 + $0xb0] sm:$0xff]
    %v107 = vld [vmem:[#allocation5 + $0xb8] sm:$0xff]
    %v108 = vld [vmem:[#allocation5 + $0xc0] sm:$0xff]
    %v109 = vld [vmem:[#allocation5 + $0xc8] sm:$0xff]
    %v110 = vld [vmem:[#allocation5 + $0xd0] sm:$0xff]
    %v111 = vld [vmem:[#allocation5 + $0xd8] sm:$0xff]
    %v112 = vld [vmem:[#allocation5 + $0xe0] sm:$0xff]
    %v113 = vld [vmem:[#allocation5 + $0xe8] sm:$0xff]
    %v114 = vld [vmem:[#allocation5 + $0xf0] sm:$0xff]
    %v115 = vld [vmem:[#allocation5 + $0xf8] sm:$0xff]
    %v116 = vld [vmem:[#allocation7] sm:$0xff]
    %v117 = vld [vmem:[#allocation7 + $0x8] sm:$0xff]
    %118 = vmatprep.subr.mxu0 %v115
    %119 = vmatpush1.msra.mxu0 %v114
    %120 = vmatprep.subr.mxu0 %v113
    %121 = vmatpush1.msra.mxu0 %v112
    %122 = vmatprep.subr.mxu0 %v111
    %123 = vmatpush1.msra.mxu0 %v110
    %124 = vmatprep.subr.mxu0 %v109
    %125 = vmatpush1.msra.mxu0 %v108
    %126 = vmatprep.subr.mxu0 %v107
    %127 = vmatpush1.msra.mxu0 %v106
    %128 = vmatprep.subr.mxu0 %v105
    %129 = vmatpush1.msra.mxu0 %v104
    %130 = vmatprep.subr.mxu0 %v103
    %131 = vmatpush1.msra.mxu0 %v102
    %132 = vmatprep.subr.mxu0 %v101
    %133 = vmatpush1.msra.mxu0 %v100
    %134 = vmatprep.subr.mxu0 %v99
    %135 = vmatpush1.msra.mxu0 %v98
    %136 = vmatprep.subr.mxu0 %v97
    %137 = vmatpush1.msra.mxu0 %v96
    %138 = vmatprep.subr.mxu0 %v95
    %139 = vmatpush1.msra.mxu0 %v94
    %140 = vmatprep.subr.mxu0 %v93
    %141 = vmatpush1.msra.mxu0 %v92
    %142 = vmatprep.subr.mxu0 %v91
    %143 = vmatpush1.msra.mxu0 %v90
    %144 = vmatprep.subr.mxu0 %v89
    %145 = vmatpush1.msra.mxu0 %v88
    %146 = vmatprep.subr.mxu0 %v87
    %147 = vmatpush1.msra.mxu0 %v86
    %148 = vmatprep.subr.mxu0 %v85
    %149 = vmatpush1.msra.mxu0 %v84
    %150 = vmatprep.subr.mxu0 0.0
    %151 = vmatpush2.msra.mxu0 0.0
    %152 = vmatprep.subr.mxu0 0.0
    %153 = vmatpush2.msra.mxu0 0.0
    %154 = vmatprep.subr.mxu0 0.0
    %155 = vmatpush2.msra.mxu0 0.0
    %156 = vmatprep.subr.mxu0 0.0
    %157 = vmatpush2.msra.mxu0 0.0
    %158 = vmatprep.subr.mxu0 0.0
    %159 = vmatpush2.msra.mxu0 0.0
    %160 = vmatprep.subr.mxu0 0.0
    %161 = vmatpush2.msra.mxu0 0.0
    %162 = vmatprep.subr.mxu0 0.0
    %163 = vmatpush2.msra.mxu0 0.0
    %164 = vmatprep.subr.mxu0 0.0
    %165 = vmatpush2.msra.mxu0 0.0
    %166 = vmatprep.subr.mxu0 0.0
    %167 = vmatpush2.msra.mxu0 0.0
    %168 = vmatprep.subr.mxu0 0.0
    %169 = vmatpush2.msra.mxu0 0.0
    %170 = vmatprep.subr.mxu0 0.0
    %171 = vmatpush2.msra.mxu0 0.0
    %172 = vmatprep.subr.mxu0 0.0
    %173 = vmatpush2.msra.mxu0 0.0
    %174 = vmatprep.subr.mxu0 0.0
    %175 = vmatpush2.msra.mxu0 0.0
    %176 = vmatprep.subr.mxu0 0.0
    %177 = vmatpush2.msra.mxu0 0.0
    %178 = vmatprep.subr.mxu0 0.0
    %179 = vmatpush2.msra.mxu0 0.0
    %180 = vmatprep.subr.mxu0 0.0
    %181 = vmatpush2.msra.mxu0 0.0
    %182 = vmatprep.mubr.f32.mxu0 0.0
    %183 = vmatmul.mubr.f32.gmra.mxu0 %v83
    %v184 = vpop.f32.mrf.mxu0
    %v185 = vadd.f32 %v116, %v184
    %v186 = vpop.f32.mrf.mxu0
    %v187 = vadd.f32 %v117, %v186
    %188 = vdwg.mxu0
    %v189 = vmul.f32 %v185, %v185
    %v190 = vmul.f32 %v187, %v187
    %v191 = vadd.f32 %v189, %v190
    %v192 = vld [vmem:[#allocation8] sm:$0xff]
    %v193 = vld [vmem:[#allocation8 + $0x8] sm:$0xff]
    %v194 = vld [vmem:[#allocation8 + $0x10] sm:$0xff]
    %v195 = vld [vmem:[#allocation8 + $0x18] sm:$0xff]
    %v196 = vld [vmem:[#allocation8 + $0x20] sm:$0xff]
    %v197 = vld [vmem:[#allocation8 + $0x28] sm:$0xff]
    %v198 = vld [vmem:[#allocation8 + $0x30] sm:$0xff]
    %v199 = vld [vmem:[#allocation8 + $0x38] sm:$0xff]
    %v200 = vld [vmem:[#allocation8 + $0x40] sm:$0xff]
    %v201 = vld [vmem:[#allocation8 + $0x48] sm:$0xff]
    %v202 = vld [vmem:[#allocation8 + $0x50] sm:$0xff]
    %v203 = vld [vmem:[#allocation8 + $0x58] sm:$0xff]
    %v204 = vld [vmem:[#allocation8 + $0x60] sm:$0xff]
    %v205 = vld [vmem:[#allocation8 + $0x68] sm:$0xff]
    %v206 = vld [vmem:[#allocation8 + $0x70] sm:$0xff]
    %v207 = vld [vmem:[#allocation8 + $0x78] sm:$0xff]
    %v208 = vld [vmem:[#allocation10] sm:$0x1]
    %v209 = vlaneseq
    %v210 = vshrl.u32 %v209, 7
    %v211 = vsub.s32 0, %v210
    %v212 = vrot.slane %v208, %v211
    %213 = vmatprep.subr.mxu0 0.0
    %214 = vmatpush1.msra.mxu0 %v207
    %215 = vmatprep.subr.mxu0 0.0
    %216 = vmatpush1.msra.mxu0 %v206
    %217 = vmatprep.subr.mxu0 0.0
    %218 = vmatpush1.msra.mxu0 %v205
    %219 = vmatprep.subr.mxu0 0.0
    %220 = vmatpush1.msra.mxu0 %v204
    %221 = vmatprep.subr.mxu0 0.0
    %222 = vmatpush1.msra.mxu0 %v203
    %223 = vmatprep.subr.mxu0 0.0
    %224 = vmatpush1.msra.mxu0 %v202
    %225 = vmatprep.subr.mxu0 0.0
    %226 = vmatpush1.msra.mxu0 %v201
    %227 = vmatprep.subr.mxu0 0.0
    %228 = vmatpush1.msra.mxu0 %v200
    %229 = vmatprep.subr.mxu0 0.0
    %230 = vmatpush1.msra.mxu0 %v199
    %231 = vmatprep.subr.mxu0 0.0
    %232 = vmatpush1.msra.mxu0 %v198
    %233 = vmatprep.subr.mxu0 0.0
    %234 = vmatpush1.msra.mxu0 %v197
    %235 = vmatprep.subr.mxu0 0.0
    %236 = vmatpush1.msra.mxu0 %v196
    %237 = vmatprep.subr.mxu0 0.0
    %238 = vmatpush1.msra.mxu0 %v195
    %239 = vmatprep.subr.mxu0 0.0
    %240 = vmatpush1.msra.mxu0 %v194
    %241 = vmatprep.subr.mxu0 0.0
    %242 = vmatpush1.msra.mxu0 %v193
    %243 = vmatprep.subr.mxu0 0.0
    %244 = vmatpush1.msra.mxu0 %v192
    %245 = vmatprep.subr.mxu0 0.0
    %246 = vmatpush2.msra.mxu0 0.0
    %247 = vmatprep.subr.mxu0 0.0
    %248 = vmatpush2.msra.mxu0 0.0
    %249 = vmatprep.subr.mxu0 0.0
    %250 = vmatpush2.msra.mxu0 0.0
    %251 = vmatprep.subr.mxu0 0.0
    %252 = vmatpush2.msra.mxu0 0.0
    %253 = vmatprep.subr.mxu0 0.0
    %254 = vmatpush2.msra.mxu0 0.0
    %255 = vmatprep.subr.mxu0 0.0
    %256 = vmatpush2.msra.mxu0 0.0
    %257 = vmatprep.subr.mxu0 0.0
    %258 = vmatpush2.msra.mxu0 0.0
    %259 = vmatprep.subr.mxu0 0.0
    %260 = vmatpush2.msra.mxu0 0.0
    %261 = vmatprep.subr.mxu0 0.0
    %262 = vmatpush2.msra.mxu0 0.0
    %263 = vmatprep.subr.mxu0 0.0
    %264 = vmatpush2.msra.mxu0 0.0
    %265 = vmatprep.subr.mxu0 0.0
    %266 = vmatpush2.msra.mxu0 0.0
    %267 = vmatprep.subr.mxu0 0.0
    %268 = vmatpush2.msra.mxu0 0.0
    %269 = vmatprep.subr.mxu0 0.0
    %270 = vmatpush2.msra.mxu0 0.0
    %271 = vmatprep.subr.mxu0 0.0
    %272 = vmatpush2.msra.mxu0 0.0
    %273 = vmatprep.subr.mxu0 0.0
    %274 = vmatpush2.msra.mxu0 0.0
    %275 = vmatprep.subr.mxu0 0.0
    %276 = vmatpush2.msra.mxu0 0.0
    %277 = vmatprep.mubr.f32.mxu0 0.0
    %278 = vmatmul.mubr.f32.gmra.mxu0 %v191
    %v279 = vpop.f32.mrf.mxu0
    %v280 = vadd.f32 %v212, %v279
    %v281 = vpop.f32.mrf.mxu0
    %282 = vdwg.mxu0
    %v283 = vmax.f32 %v280, 0.0
    %v284 = vld [vmem:[#allocation8 + $0x80] sm:$0xff]
    %v285 = vld [vmem:[#allocation8 + $0x88] sm:$0xff]
    %v286 = vld [vmem:[#allocation8 + $0x90] sm:$0xff]
    %v287 = vld [vmem:[#allocation8 + $0x98] sm:$0xff]
    %v288 = vld [vmem:[#allocation8 + $0xa0] sm:$0xff]
    %v289 = vld [vmem:[#allocation8 + $0xa8] sm:$0xff]
    %v290 = vld [vmem:[#allocation8 + $0xb0] sm:$0xff]
    %v291 = vld [vmem:[#allocation8 + $0xb8] sm:$0xff]
    %v292 = vld [vmem:[#allocation8 + $0xc0] sm:$0xff]
    %v293 = vld [vmem:[#allocation8 + $0xc8] sm:$0xff]
    %v294 = vld [vmem:[#allocation8 + $0xd0] sm:$0xff]
    %v295 = vld [vmem:[#allocation8 + $0xd8] sm:$0xff]
    %v296 = vld [vmem:[#allocation8 + $0xe0] sm:$0xff]
    %v297 = vld [vmem:[#allocation8 + $0xe8] sm:$0xff]
    %v298 = vld [vmem:[#allocation8 + $0xf0] sm:$0xff]
    %v299 = vld [vmem:[#allocation8 + $0xf8] sm:$0xff]
    %v300 = vld [vmem:[#allocation10 + $0x1] sm:$0x1]
    %v301 = vlaneseq
    %v302 = vshrl.u32 %v301, 7
    %v303 = vsub.s32 0, %v302
    %v304 = vrot.slane %v300, %v303
    %305 = vmatprep.subr.mxu0 0.0
    %306 = vmatpush1.msra.mxu0 %v299
    %307 = vmatprep.subr.mxu0 0.0
    %308 = vmatpush1.msra.mxu0 %v298
    %309 = vmatprep.subr.mxu0 0.0
    %310 = vmatpush1.msra.mxu0 %v297
    %311 = vmatprep.subr.mxu0 0.0
    %312 = vmatpush1.msra.mxu0 %v296
    %313 = vmatprep.subr.mxu0 0.0
    %314 = vmatpush1.msra.mxu0 %v295
    %315 = vmatprep.subr.mxu0 0.0
    %316 = vmatpush1.msra.mxu0 %v294
    %317 = vmatprep.subr.mxu0 0.0
    %318 = vmatpush1.msra.mxu0 %v293
    %319 = vmatprep.subr.mxu0 0.0
    %320 = vmatpush1.msra.mxu0 %v292
    %321 = vmatprep.subr.mxu0 0.0
    %322 = vmatpush1.msra.mxu0 %v291
    %323 = vmatprep.subr.mxu0 0.0
    %324 = vmatpush1.msra.mxu0 %v290
    %325 = vmatprep.subr.mxu0 0.0
    %326 = vmatpush1.msra.mxu0 %v289
    %327 = vmatprep.subr.mxu0 0.0
    %328 = vmatpush1.msra.mxu0 %v288
    %329 = vmatprep.subr.mxu0 0.0
    %330 = vmatpush1.msra.mxu0 %v287
    %331 = vmatprep.subr.mxu0 0.0
    %332 = vmatpush1.msra.mxu0 %v286
    %333 = vmatprep.subr.mxu0 0.0
    %334 = vmatpush1.msra.mxu0 %v285
    %335 = vmatprep.subr.mxu0 0.0
    %336 = vmatpush1.msra.mxu0 %v284
    %337 = vmatprep.subr.mxu0 0.0
    %338 = vmatpush2.msra.mxu0 0.0
    %339 = vmatprep.subr.mxu0 0.0
    %340 = vmatpush2.msra.mxu0 0.0
    %341 = vmatprep.subr.mxu0 0.0
    %342 = vmatpush2.msra.mxu0 0.0
    %343 = vmatprep.subr.mxu0 0.0
    %344 = vmatpush2.msra.mxu0 0.0
    %345 = vmatprep.subr.mxu0 0.0
    %346 = vmatpush2.msra.mxu0 0.0
    %347 = vmatprep.subr.mxu0 0.0
    %348 = vmatpush2.msra.mxu0 0.0
    %349 = vmatprep.subr.mxu0 0.0
    %350 = vmatpush2.msra.mxu0 0.0
    %351 = vmatprep.subr.mxu0 0.0
    %352 = vmatpush2.msra.mxu0 0.0
    %353 = vmatprep.subr.mxu0 0.0
    %354 = vmatpush2.msra.mxu0 0.0
    %355 = vmatprep.subr.mxu0 0.0
    %356 = vmatpush2.msra.mxu0 0.0
    %357 = vmatprep.subr.mxu0 0.0
    %358 = vmatpush2.msra.mxu0 0.0
    %359 = vmatprep.subr.mxu0 0.0
    %360 = vmatpush2.msra.mxu0 0.0
    %361 = vmatprep.subr.mxu0 0.0
    %362 = vmatpush2.msra.mxu0 0.0
    %363 = vmatprep.subr.mxu0 0.0
    %364 = vmatpush2.msra.mxu0 0.0
    %365 = vmatprep.subr.mxu0 0.0
    %366 = vmatpush2.msra.mxu0 0.0
    %367 = vmatprep.subr.mxu0 0.0
    %368 = vmatpush2.msra.mxu0 0.0
    %369 = vmatprep.mubr.f32.mxu0 0.0
    %370 = vmatmul.mubr.f32.gmra.mxu0 %v283
    %v371 = vpop.f32.mrf.mxu0
    %v372 = vadd.f32 %v304, %v371
    %v373 = vpop.f32.mrf.mxu0
    %374 = vdwg.mxu0
    %v375 = vmax.f32 %v372, 0.0
    %v376 = vld [vmem:[#allocation8 + $0x100] sm:$0xff]
    %v377 = vld [vmem:[#allocation8 + $0x108] sm:$0xff]
    %v378 = vld [vmem:[#allocation8 + $0x110] sm:$0xff]
    %v379 = vld [vmem:[#allocation8 + $0x118] sm:$0xff]
    %v380 = vld [vmem:[#allocation8 + $0x120] sm:$0xff]
    %v381 = vld [vmem:[#allocation8 + $0x128] sm:$0xff]
    %v382 = vld [vmem:[#allocation8 + $0x130] sm:$0xff]
    %v383 = vld [vmem:[#allocation8 + $0x138] sm:$0xff]
    %v384 = vld [vmem:[#allocation8 + $0x140] sm:$0xff]
    %v385 = vld [vmem:[#allocation8 + $0x148] sm:$0xff]
    %v386 = vld [vmem:[#allocation8 + $0x150] sm:$0xff]
    %v387 = vld [vmem:[#allocation8 + $0x158] sm:$0xff]
    %v388 = vld [vmem:[#allocation8 + $0x160] sm:$0xff]
    %v389 = vld [vmem:[#allocation8 + $0x168] sm:$0xff]
    %v390 = vld [vmem:[#allocation8 + $0x170] sm:$0xff]
    %v391 = vld [vmem:[#allocation8 + $0x178] sm:$0xff]
    %v392 = vld [vmem:[#allocation10 + $0x2] sm:$0x1]
    %v393 = vlaneseq
    %v394 = vshrl.u32 %v393, 7
    %v395 = vsub.s32 0, %v394
    %v396 = vrot.slane %v392, %v395
    %397 = vmatprep.subr.mxu0 0.0
    %398 = vmatpush1.msra.mxu0 %v391
    %399 = vmatprep.subr.mxu0 0.0
    %400 = vmatpush1.msra.mxu0 %v390
    %401 = vmatprep.subr.mxu0 0.0
    %402 = vmatpush1.msra.mxu0 %v389
    %403 = vmatprep.subr.mxu0 0.0
    %404 = vmatpush1.msra.mxu0 %v388
    %405 = vmatprep.subr.mxu0 0.0
    %406 = vmatpush1.msra.mxu0 %v387
    %407 = vmatprep.subr.mxu0 0.0
    %408 = vmatpush1.msra.mxu0 %v386
    %409 = vmatprep.subr.mxu0 0.0
    %410 = vmatpush1.msra.mxu0 %v385
    %411 = vmatprep.subr.mxu0 0.0
    %412 = vmatpush1.msra.mxu0 %v384
    %413 = vmatprep.subr.mxu0 0.0
    %414 = vmatpush1.msra.mxu0 %v383
    %415 = vmatprep.subr.mxu0 0.0
    %416 = vmatpush1.msra.mxu0 %v382
    %417 = vmatprep.subr.mxu0 0.0
    %418 = vmatpush1.msra.mxu0 %v381
    %419 = vmatprep.subr.mxu0 0.0
    %420 = vmatpush1.msra.mxu0 %v380
    %421 = vmatprep.subr.mxu0 0.0
    %422 = vmatpush1.msra.mxu0 %v379
    %423 = vmatprep.subr.mxu0 0.0
    %424 = vmatpush1.msra.mxu0 %v378
    %425 = vmatprep.subr.mxu0 0.0
    %426 = vmatpush1.msra.mxu0 %v377
    %427 = vmatprep.subr.mxu0 0.0
    %428 = vmatpush1.msra.mxu0 %v376
    %429 = vmatprep.subr.mxu0 0.0
    %430 = vmatpush2.msra.mxu0 0.0
    %431 = vmatprep.subr.mxu0 0.0
    %432 = vmatpush2.msra.mxu0 0.0
    %433 = vmatprep.subr.mxu0 0.0
    %434 = vmatpush2.msra.mxu0 0.0
    %435 = vmatprep.subr.mxu0 0.0
    %436 = vmatpush2.msra.mxu0 0.0
    %437 = vmatprep.subr.mxu0 0.0
    %438 = vmatpush2.msra.mxu0 0.0
    %439 = vmatprep.subr.mxu0 0.0
    %440 = vmatpush2.msra.mxu0 0.0
    %441 = vmatprep.subr.mxu0 0.0
    %442 = vmatpush2.msra.mxu0 0.0
    %443 = vmatprep.subr.mxu0 0.0
    %444 = vmatpush2.msra.mxu0 0.0
    %445 = vmatprep.subr.mxu0 0.0
    %446 = vmatpush2.msra.mxu0 0.0
    %447 = vmatprep.subr.mxu0 0.0
    %448 = vmatpush2.msra.mxu0 0.0
    %449 = vmatprep.subr.mxu0 0.0
    %450 = vmatpush2.msra.mxu0 0.0
    %451 = vmatprep.subr.mxu0 0.0
    %452 = vmatpush2.msra.mxu0 0.0
    %453 = vmatprep.subr.mxu0 0.0
    %454 = vmatpush2.msra.mxu0 0.0
    %455 = vmatprep.subr.mxu0 0.0
    %456 = vmatpush2.msra.mxu0 0.0
    %457 = vmatprep.subr.mxu0 0.0
    %458 = vmatpush2.msra.mxu0 0.0
    %459 = vmatprep.subr.mxu0 0.0
    %460 = vmatpush2.msra.mxu0 0.0
    %461 = vmatprep.mubr.f32.mxu0 0.0
    %462 = vmatmul.mubr.f32.gmra.mxu0 %v375
    %v463 = vpop.f32.mrf.mxu0
    %v464 = vadd.f32 %v396, %v463
    %v465 = vpop.f32.mrf.mxu0
    %466 = vdwg.mxu0
    %467 = vst [vmem:[#allocation11] sm:$0xff] %v464
    // Predicated region
    $region42: #{tpu_custom_call.1} parent=1 // pred_check
      _
    $region43: #{tpu_custom_call.1} parent=1 // pred_check_branch
      %469 = sbr.rel (0) target = $region45
    $region44: #{tpu_custom_call.1} parent=1 // pred_region
      %s471 = ssub.s32 128, 128
      %472 = vsyncadd [#allocation4], %s471
      %s474 = sshll.u32 [#allocation11], 4
      %s475 = int_to_ptr.vmem [resolvable:$true] %s474
      %477 = dma.vmem_to_hbm [thread:$0]  %s475, 128, %s5, [#allocation4]
    $region45: #{tpu_custom_call.1} parent=1 // pred_fallthru
      _
    // Predicated region
    $region46: #{tpu_custom_call.1} parent=1 // pred_check
      _
    $region47: #{tpu_custom_call.1} parent=1 // pred_check_branch
      %479 = sbr.rel (0) target = $region49
    $region48: #{tpu_custom_call.1} parent=1 // pred_region
      %480 = dma.done [#allocation4], 128
    $region49: #{tpu_custom_call.1} parent=1 // pred_fallthru
      _
    %481 = vsyncpa [#allocation3], 1
    %482 = vsyncpa [#allocation6], 1
    %483 = vsyncpa [#allocation9], 1
    %484 = vsyncpa [#allocation4], 1

</llo_original>
